<compile_context>
chip_gen: v7x
topology: tpu7x:2x2x1
jax: 0.10.0
libtpu: 0.0.40
codegen_flags: <defaults>
</compile_context>

<pallas_src>
import jax
import jax.numpy as jnp
from jax.experimental import pallas as pl
from jax.experimental.pallas import tpu as pltpu


_VMEM_LIMIT_BYTES = 32 * 1024 * 1024      # explicit scoped-VMEM limit (safe on v5e/v6e/v7x)
_DEFAULT_VMEM_BUDGET = 24 * 1024 * 1024   # working-set cap -> headroom even on v7x (64 MiB)


def _pick_row_tile(requested, n, bytes_per_row, fixed_bytes, budget_bytes):
    """Largest row tile <= requested whose double-buffered blocks fit the budget."""
    avail = max(budget_bytes - fixed_bytes, 1 << 20)
    cap = max(8, ((avail // (2 * max(bytes_per_row, 1))) // 8) * 8)
    tn = min(requested, cap)
    if tn >= n:
        return n                      # single full block (works for any n, incl. n < 8)
    return max(8, (tn // 8) * 8)      # tiled blocks: sublane dim must be a multiple of 8


# ----------------------------------------------------------------------------
# non_linear=True :  z = fc2(relu(fc1(cat([x1, x2], -1))))
# ----------------------------------------------------------------------------
def _mlp_kernel(x1_ref, x2_ref, w1_ref, b1_ref, w2_ref, b2_ref, z_ref):
    # In-kernel concat keeps fc1 a single K=(dim1+dim2) MXU pass; the
    # concatenated activation never exists in HBM.
    x = jnp.concatenate([x1_ref[...], x2_ref[...]], axis=-1)
    h = jnp.dot(x, w1_ref[...], preferred_element_type=jnp.float32)
    h = jnp.maximum(h + b1_ref[...], 0.0)          # bias + ReLU in f32
    h = h.astype(w2_ref.dtype)                     # feed MXU in param dtype (no-op for f32)
    z = jnp.dot(h, w2_ref[...], preferred_element_type=jnp.float32) + b2_ref[...]
    z_ref[...] = z.astype(z_ref.dtype)


def prepare_nonlinear_params(w1, b1, w2, b2):
    """Hoisted weight preprocessing: call once at parameter-load time."""
    return {
        "w1t": jnp.asarray(w1).T,                 # (dim1+dim2, dim3)
        "b1": jnp.asarray(b1).reshape(1, -1),     # (1, dim3)
        "w2t": jnp.asarray(w2).T,                 # (dim3, dim4)
        "b2": jnp.asarray(b2).reshape(1, -1),     # (1, dim4)
    }


def merge_layer_nonlinear(x1, x2, params, *, row_tile=1024,
                          vmem_budget_bytes=_DEFAULT_VMEM_BUDGET):
    """MergeLayer(non_linear=True).forward.  Returns (z, None)."""
    d1, d2 = x1.shape[-1], x2.shape[-1]
    lead = x1.shape[:-1]
    dim3, dim4 = params["w1t"].shape[1], params["w2t"].shape[1]

    x1f = x1.reshape(-1, d1)
    x2f = x2.reshape(-1, d2)
    n = x1f.shape[0]

    itemsize = jnp.dtype(x1.dtype).itemsize
    # per-row I/O + in-kernel intermediates (concat slab + hidden activation)
    bytes_per_row = (2 * (d1 + d2) + dim3 + dim4) * 4
    fixed = ((d1 + d2) * dim3 + dim3 * dim4 + dim3 + dim4) * itemsize    # resident weights
    tn = _pick_row_tile(row_tile, n, bytes_per_row, fixed, vmem_budget_bytes)

    grid = (pl.cdiv(n, tn),)
    z = pl.pallas_call(
        _mlp_kernel,
        out_shape=jax.ShapeDtypeStruct((n, dim4), x1.dtype),
        grid=grid,
        in_specs=[
            pl.BlockSpec((tn, d1), lambda i: (i, 0)),
            pl.BlockSpec((tn, d2), lambda i: (i, 0)),
            pl.BlockSpec((d1 + d2, dim3), lambda i: (0, 0)),
            pl.BlockSpec((1, dim3), lambda i: (0, 0)),
            pl.BlockSpec((dim3, dim4), lambda i: (0, 0)),
            pl.BlockSpec((1, dim4), lambda i: (0, 0)),
        ],
        out_specs=pl.BlockSpec((tn, dim4), lambda i: (i, 0)),
        compiler_params=pltpu.CompilerParams(
            dimension_semantics=("parallel",),
            vmem_limit_bytes=_VMEM_LIMIT_BYTES,
        ),
        # TODO(synk): if DMA is still exposed on v5e at large n, bump the two
        # row-input BlockSpecs to pipeline_mode=pl.Buffered(3).
    )(x1f, x2f, params["w1t"], params["b1"], params["w2t"], params["b2"])

    return z.reshape(*lead, dim4), None


# ----------------------------------------------------------------------------
# non_linear=False :  z_walk = fc(cat([x1, x2], -2)).squeeze(-1)
#                     z      = z_walk.sum(-1, keepdim=True)
# ----------------------------------------------------------------------------
def _walk_kernel(x1_ref, x2_ref, w_ref, b_ref, zw_ref, z_ref):
    # x1_ref: (tn, W1, D)  x2_ref: (tn, W2, D)  w_ref: (1, D)  b_ref: (1, 1)
    # (D -> 1) matvec on the VPU (multiply) + XLU (lane reduction) instead of a
    # width-1 MXU matmul; the walk-dim concat happens only on the tiny outputs.
    d = w_ref.shape[-1]
    w = w_ref[...].astype(jnp.float32).reshape(1, 1, d)                  # (1, 1, D)
    b = b_ref[...].astype(jnp.float32)                                   # (1, 1)
    zw1 = jnp.sum(x1_ref[...].astype(jnp.float32) * w, axis=-1) + b      # (tn, W1)
    zw2 = jnp.sum(x2_ref[...].astype(jnp.float32) * w, axis=-1) + b      # (tn, W2)
    zw = jnp.concatenate([zw1, zw2], axis=-1)                            # (tn, W1+W2)
    zw_ref[...] = zw.astype(zw_ref.dtype)
    z_ref[...] = jnp.sum(zw, axis=-1, keepdims=True).astype(z_ref.dtype)


def prepare_linear_params(w, b):
    """Hoisted weight preprocessing for the non_linear=False path."""
    return {
        "w": jnp.asarray(w).reshape(1, -1),       # (1, D)
        "b": jnp.asarray(b).reshape(1, 1),        # (1, 1)
    }


def merge_layer_linear(x1, x2, params, *, row_tile=256,
                       vmem_budget_bytes=_DEFAULT_VMEM_BUDGET):
    """MergeLayer(non_linear=False).forward.  Returns (z, z_walk)."""
    lead = x1.shape[:-2]
    w1n, w2n, d = x1.shape[-2], x2.shape[-2], x1.shape[-1]
    walks = w1n + w2n

    x1f = x1.reshape(-1, w1n, d)
    x2f = x2.reshape(-1, w2n, d)
    n = x1f.shape[0]

    itemsize = jnp.dtype(x1.dtype).itemsize
    bytes_per_row = (walks * d + walks + 1) * itemsize + walks * d * 4
    fixed = (d + 1) * itemsize
    tn = _pick_row_tile(row_tile, n, bytes_per_row, fixed, vmem_budget_bytes)

    grid = (pl.cdiv(n, tn),)
    z_walk_flat, z_flat = pl.pallas_call(
        _walk_kernel,
        out_shape=(
            jax.ShapeDtypeStruct((n, walks), x1.dtype),   # z_walk (flattened)
            jax.ShapeDtypeStruct((n, 1), x1.dtype),       # z      (flattened)
        ),
        grid=grid,
        in_specs=[
            pl.BlockSpec((tn, w1n, d), lambda i: (i, 0, 0)),
            pl.BlockSpec((tn, w2n, d), lambda i: (i, 0, 0)),
            pl.BlockSpec((1, d), lambda i: (0, 0)),
            pl.BlockSpec((1, 1), lambda i: (0, 0)),
        ],
        out_specs=(
            pl.BlockSpec((tn, walks), lambda i: (i, 0)),
            pl.BlockSpec((tn, 1), lambda i: (i, 0)),
        ),
        compiler_params=pltpu.CompilerParams(
            dimension_semantics=("parallel",),
            vmem_limit_bytes=_VMEM_LIMIT_BYTES,
        ),
    )(x1f, x2f, params["w"], params["b"])

    return z_flat.reshape(*lead, 1), z_walk_flat.reshape(*lead, walks)


# ----------------------------------------------------------------------------
def _xavier_normal(key, out_dim, in_dim, dtype=jnp.float32):
    std = (2.0 / (in_dim + out_dim)) ** 0.5
    return std * jax.random.normal(key, (out_dim, in_dim), dtype)


if __name__ == "__main__":
    key = jax.random.PRNGKey(0)
    B, S = 2, 8
    dim1, dim2, dim3, dim4 = 32, 32, 32, 16
    ks = jax.random.split(key, 8)

    x1 = jax.random.normal(ks[0], (B, S, dim1), jnp.float32)
    x2 = jax.random.normal(ks[1], (B, S, dim2), jnp.float32)

    # ---- non_linear=True parameters (fc1, fc2) ----
    w1 = _xavier_normal(ks[2], dim3, dim1 + dim2)
    b1 = 0.01 * jax.random.normal(ks[3], (dim3,), jnp.float32)
    w2 = _xavier_normal(ks[4], dim4, dim3)
    b2 = 0.01 * jax.random.normal(ks[5], (dim4,), jnp.float32)

    nl_params = prepare_nonlinear_params(w1, b1, w2, b2)   # hoisted: done once
    z, z_walk = merge_layer_nonlinear(x1, x2, nl_params)
    z = jax.block_until_ready(z)
    assert z_walk is None
    assert z.shape == (B, S, dim4)

    # reference (plain JAX)
    x_cat = jnp.concatenate([x1, x2], axis=-1)
    z_ref = jnp.maximum(x_cat @ w1.T + b1, 0.0) @ w2.T + b2
    assert jnp.allclose(z, z_ref, atol=1e-4, rtol=1e-4)

    # ---- non_linear=False parameters (fc : dim1 -> 1), requires dim1 == dim2 ----
    wf = _xavier_normal(ks[6], 1, dim1)
    bf = 0.01 * jax.random.normal(ks[7], (1,), jnp.float32)

    lin_params = prepare_linear_params(wf, bf)              # hoisted: done once
    zl, zwl = merge_layer_linear(x1, x2, lin_params)
    zl = jax.block_until_ready(zl)
    assert zl.shape == (B, 1) and zwl.shape == (B, 2 * S)

    xc = jnp.concatenate([x1, x2], axis=-2)
    zw_ref = (xc @ wf.T + bf)[..., 0]
    zl_ref = zw_ref.sum(axis=-1, keepdims=True)
    assert jnp.allclose(zwl, zw_ref, atol=1e-4, rtol=1e-4)
    assert jnp.allclose(zl, zl_ref, atol=1e-4, rtol=1e-4)

    print("KERNEL_OK")
</pallas_src>

<mosaic_0001>
module attributes {stable_mosaic.version = 11 : i64} {
  func.func @_mlp_kernel(%arg0: i32, %arg1: memref<16x32xf32, #tpu.memory_space<vmem>>, %arg2: memref<16x32xf32, #tpu.memory_space<vmem>>, %arg3: memref<64x32xf32, #tpu.memory_space<vmem>>, %arg4: memref<1x32xf32, #tpu.memory_space<vmem>>, %arg5: memref<32x16xf32, #tpu.memory_space<vmem>>, %arg6: memref<1x16xf32, #tpu.memory_space<vmem>>, %arg7: memref<16x16xf32, #tpu.memory_space<vmem>>) attributes {dimension_semantics = [#tpu.dimension_semantics<parallel>], iteration_bounds = array<i64: 1>, scalar_prefetch = 0 : i64, scratch_operands = 0 : i64, tpu.core_type = #tpu.core_type<tc>, window_params = [{transform_indices = @transform_0, window_bounds = array<i64: 16, 32>}, {transform_indices = @transform_1, window_bounds = array<i64: 16, 32>}, {pipeline_mode = #tpu.pipeline_mode<synchronous>, transform_indices = @transform_2, window_bounds = array<i64: 64, 32>}, {pipeline_mode = #tpu.pipeline_mode<synchronous>, transform_indices = @transform_3, window_bounds = array<i64: 1, 32>}, {pipeline_mode = #tpu.pipeline_mode<synchronous>, transform_indices = @transform_4, window_bounds = array<i64: 32, 16>}, {pipeline_mode = #tpu.pipeline_mode<synchronous>, transform_indices = @transform_5, window_bounds = array<i64: 1, 16>}, {transform_indices = @transform_6, window_bounds = array<i64: 16, 16>}]} {
    %c0 = arith.constant 0 : index
    %c0_0 = arith.constant 0 : index
    %0 = vector.load %arg1[%c0, %c0_0] : memref<16x32xf32, #tpu.memory_space<vmem>>, vector<16x32xf32>
    %c0_1 = arith.constant 0 : index
    %c0_2 = arith.constant 0 : index
    %1 = vector.load %arg2[%c0_1, %c0_2] : memref<16x32xf32, #tpu.memory_space<vmem>>, vector<16x32xf32>
    %2 = tpu.concatenate %0, %1 in 1 : vector<16x32xf32>, vector<16x32xf32> -> vector<16x64xf32>
    %c0_3 = arith.constant 0 : index
    %c0_4 = arith.constant 0 : index
    %3 = vector.load %arg3[%c0_3, %c0_4] : memref<64x32xf32, #tpu.memory_space<vmem>>, vector<64x32xf32>
    %cst = arith.constant dense<0.000000e+00> : vector<16x32xf32>
    %4 = tpu.matmul %2, %3, %cst {dimension_numbers = #tpu.dot_dimension_numbers<[1], [0], [0], [1], [0, 0, 1, 1], [], []>} : vector<16x64xf32>, vector<64x32xf32>, vector<16x32xf32> -> vector<16x32xf32>
    %c0_5 = arith.constant 0 : index
    %c0_6 = arith.constant 0 : index
    %5 = vector.load %arg4[%c0_5, %c0_6] : memref<1x32xf32, #tpu.memory_space<vmem>>, vector<1x32xf32>
    %6 = vector.broadcast %5 : vector<1x32xf32> to vector<16x32xf32>
    %7 = arith.addf %4, %6 : vector<16x32xf32>
    %cst_7 = arith.constant 0.000000e+00 : f32
    %8 = vector.broadcast %cst_7 : f32 to vector<16x32xf32>
    %9 = arith.maximumf %7, %8 : vector<16x32xf32>
    %c0_8 = arith.constant 0 : index
    %c0_9 = arith.constant 0 : index
    %10 = vector.load %arg5[%c0_8, %c0_9] : memref<32x16xf32, #tpu.memory_space<vmem>>, vector<32x16xf32>
    %cst_10 = arith.constant dense<0.000000e+00> : vector<16x16xf32>
    %11 = tpu.matmul %9, %10, %cst_10 {dimension_numbers = #tpu.dot_dimension_numbers<[1], [0], [0], [1], [0, 0, 1, 1], [], []>} : vector<16x32xf32>, vector<32x16xf32>, vector<16x16xf32> -> vector<16x16xf32>
    %c0_11 = arith.constant 0 : index
    %c0_12 = arith.constant 0 : index
    %12 = vector.load %arg6[%c0_11, %c0_12] : memref<1x16xf32, #tpu.memory_space<vmem>>, vector<1x16xf32>
    %13 = vector.broadcast %12 : vector<1x16xf32> to vector<16x16xf32>
    %14 = arith.addf %11, %13 : vector<16x16xf32>
    %c0_13 = arith.constant 0 : index
    %c0_14 = arith.constant 0 : index
    %15 = vector.load %arg7[%c0_13, %c0_14] : memref<16x16xf32, #tpu.memory_space<vmem>>, vector<16x16xf32>
    tpu.vector_store %arg7[%c0_13, %c0_14], %14 {strides = array<i32>} : memref<16x16xf32, #tpu.memory_space<vmem>>, vector<16x16xf32>,
    return
  }
  func.func @transform_0(%arg0: i32) -> (i32, i32) {
    %c0_i32 = arith.constant 0 : i32
    %c0_i32_0 = arith.constant 0 : i32
    return %arg0, %c0_i32 : i32, i32
  }
  func.func @transform_1(%arg0: i32) -> (i32, i32) {
    %c0_i32 = arith.constant 0 : i32
    %c0_i32_0 = arith.constant 0 : i32
    return %arg0, %c0_i32 : i32, i32
  }
  func.func @transform_2(%arg0: i32) -> (i32, i32) {
    %c0_i32 = arith.constant 0 : i32
    %c0_i32_0 = arith.constant 0 : i32
    %c0_i32_1 = arith.constant 0 : i32
    return %c0_i32, %c0_i32_0 : i32, i32
  }
  func.func @transform_3(%arg0: i32) -> (i32, i32) {
    %c0_i32 = arith.constant 0 : i32
    %c0_i32_0 = arith.constant 0 : i32
    %c0_i32_1 = arith.constant 0 : i32
    return %c0_i32, %c0_i32_0 : i32, i32
  }
  func.func @transform_4(%arg0: i32) -> (i32, i32) {
    %c0_i32 = arith.constant 0 : i32
    %c0_i32_0 = arith.constant 0 : i32
    %c0_i32_1 = arith.constant 0 : i32
    return %c0_i32, %c0_i32_0 : i32, i32
  }
  func.func @transform_5(%arg0: i32) -> (i32, i32) {
    %c0_i32 = arith.constant 0 : i32
    %c0_i32_0 = arith.constant 0 : i32
    %c0_i32_1 = arith.constant 0 : i32
    return %c0_i32, %c0_i32_0 : i32, i32
  }
  func.func @transform_6(%arg0: i32) -> (i32, i32) {
    %c0_i32 = arith.constant 0 : i32
    %c0_i32_0 = arith.constant 0 : i32
    return %arg0, %c0_i32 : i32, i32
  }
}

</mosaic_0001>

<llo_original>
// kernel: tpu_custom_call.1
$region0: #{tpu_custom_call.1}
  #allocation0 [shape = 'u32[]', space=smem, size = 0x4, offset = 0x4, fixed_abs, tag = 'smem constant byte address 0x4 - core index']
  #allocation1 [shape = 'u32[144,128]{1,0:T(1,128)}', space=vmem, size = 0x12000, scoped, tag = 'internal scratch']
  %s0 = inlined_call_operand.vmem [shape: f32[16,32], index: 0, kind: input, shape index: {}]
  %s1 = inlined_call_operand.vmem [shape: f32[16,32], index: 1, kind: input, shape index: {}]
  %s2 = inlined_call_operand.vmem [shape: f32[64,32], index: 2, kind: input, shape index: {}]
  %s3 = inlined_call_operand.vmem [shape: f32[1,32], index: 3, kind: input, shape index: {}]
  %s4 = inlined_call_operand.vmem [shape: f32[32,16], index: 4, kind: input, shape index: {}]
  %s5 = inlined_call_operand.vmem [shape: f32[1,16], index: 5, kind: input, shape index: {}]
  %s6 = inlined_call_operand.hbm [shape: f32[16,16], index: 6, kind: output, shape index: {}]
  %s7 = sld [smem:[#allocation0]]
  $region34: #{tpu_custom_call.1} parent=0
    _
  %s9 = ssub.s32 1, %s7
  %s10 = scalar_select 0, %s9, %s7
  $region1: #{tpu_custom_call.1} parent=0
    #allocation2 [shape = 'u8[8192]{0}', space=vmem, size = 0x2000, scoped, tag = 'output window, operand 0, single buffered']
    #allocation3 [shape = 's32[1]{0}', space=sflag, size = 0x4, scoped, tag = 'scoped memory for tpu_custom_call.1']
    %11 = vsyncpa [#allocation3], 0
    // Predicated region
    $region2: #{tpu_custom_call.1} parent=1 // pred_check
      _
    $region3: #{tpu_custom_call.1} parent=1 // pred_check_branch
      %13 = sbr.rel (0) target = $region5
    $region4: #{tpu_custom_call.1} parent=1 // pred_region
      _
    $region5: #{tpu_custom_call.1} parent=1 // pred_fallthru
      _
    // Predicated region
    $region6: #{tpu_custom_call.1} parent=1 // pred_check
      _
    $region7: #{tpu_custom_call.1} parent=1 // pred_check_branch
      %15 = sbr.rel (0) target = $region9
    $region8: #{tpu_custom_call.1} parent=1 // pred_region
      _
    $region9: #{tpu_custom_call.1} parent=1 // pred_fallthru
      _
    // Predicated region
    $region10: #{tpu_custom_call.1} parent=1 // pred_check
      _
    $region11: #{tpu_custom_call.1} parent=1 // pred_check_branch
      %17 = sbr.rel (0) target = $region13
    $region12: #{tpu_custom_call.1} parent=1 // pred_region
      _
    $region13: #{tpu_custom_call.1} parent=1 // pred_fallthru
      _
    // Predicated region
    $region14: #{tpu_custom_call.1} parent=1 // pred_check
      _
    $region15: #{tpu_custom_call.1} parent=1 // pred_check_branch
      %19 = sbr.rel (0) target = $region17
    $region16: #{tpu_custom_call.1} parent=1 // pred_region
      _
    $region17: #{tpu_custom_call.1} parent=1 // pred_fallthru
      _
    // Predicated region
    $region18: #{tpu_custom_call.1} parent=1 // pred_check
      _
    $region19: #{tpu_custom_call.1} parent=1 // pred_check_branch
      %21 = sbr.rel (0) target = $region21
    $region20: #{tpu_custom_call.1} parent=1 // pred_region
      _
    $region21: #{tpu_custom_call.1} parent=1 // pred_fallthru
      _
    // Predicated region
    $region22: #{tpu_custom_call.1} parent=1 // pred_check
      _
    $region23: #{tpu_custom_call.1} parent=1 // pred_check_branch
      %23 = sbr.rel (0) target = $region25
    $region24: #{tpu_custom_call.1} parent=1 // pred_region
      _
    $region25: #{tpu_custom_call.1} parent=1 // pred_fallthru
      _
    %v24 = vld [vmem:[%s0] sm:$0xff]
    %v25 = vld [vmem:[%s0 + $0x8] sm:$0xff]
    %v26 = vld [vmem:[%s1] sm:$0xff]
    %v27 = vld [vmem:[%s1 + $0x8] sm:$0xff]
    %30 = vrot.lane.b32.xlu0 %v26, 32
    %v31 = vpop.permute.xlu0 %30
    %32 = vrot.lane.b32.xlu0 %v27, 32
    %v33 = vpop.permute.xlu0 %32
    %vm36 = vcmask 261120
    %v37 = vsel %vm36, %v24, %v31
    %v38 = vsel %vm36, %v25, %v33
    %v39 = vld [vmem:[%s2] sm:$0xff]
    %v40 = vld [vmem:[%s2 + $0x8] sm:$0xff]
    %v41 = vld [vmem:[%s2 + $0x10] sm:$0xff]
    %v42 = vld [vmem:[%s2 + $0x18] sm:$0xff]
    %v43 = vld [vmem:[%s2 + $0x20] sm:$0xff]
    %v44 = vld [vmem:[%s2 + $0x28] sm:$0xff]
    %v45 = vld [vmem:[%s2 + $0x30] sm:$0xff]
    %v46 = vld [vmem:[%s2 + $0x38] sm:$0xff]
    %v47 = vld [vmem:[%s3] sm:$0x1]
    %v49 = vlaneseq
    %v50 = vshrl.u32 %v49, 7
    %v51 = vsub.s32 0, %v50
    %v52 = vrot.slane %v47, %v51
    %vm54 = vcmask 523264
    %v56 = vsel %vm54, %v37, 0
    %v59 = vsel %vm54, %v38, 0
    %61 = vmatprep.subr.mxu0 0.0
    %62 = vmatpush1.msra.mxu0 %v39
    %63 = vmatprep.subr.mxu0 0.0
    %64 = vmatpush1.msra.mxu0 %v40
    %65 = vmatprep.subr.mxu0 0.0
    %66 = vmatpush1.msra.mxu0 %v41
    %67 = vmatprep.subr.mxu0 0.0
    %68 = vmatpush1.msra.mxu0 %v42
    %69 = vmatprep.subr.mxu0 0.0
    %70 = vmatpush1.msra.mxu0 %v43
    %71 = vmatprep.subr.mxu0 0.0
    %72 = vmatpush1.msra.mxu0 %v44
    %73 = vmatprep.subr.mxu0 0.0
    %74 = vmatpush1.msra.mxu0 %v45
    %75 = vmatprep.subr.mxu0 0.0
    %76 = vmatpush1.msra.mxu0 %v46
    %77 = vmatprep.subr.mxu0 0.0
    %78 = vmatpush1.msra.mxu0 0.0
    %79 = vmatprep.subr.mxu0 0.0
    %80 = vmatpush1.msra.mxu0 0.0
    %81 = vmatprep.subr.mxu0 0.0
    %82 = vmatpush1.msra.mxu0 0.0
    %83 = vmatprep.subr.mxu0 0.0
    %84 = vmatpush1.msra.mxu0 0.0
    %85 = vmatprep.subr.mxu0 0.0
    %86 = vmatpush1.msra.mxu0 0.0
    %87 = vmatprep.subr.mxu0 0.0
    %88 = vmatpush1.msra.mxu0 0.0
    %89 = vmatprep.subr.mxu0 0.0
    %90 = vmatpush1.msra.mxu0 0.0
    %91 = vmatprep.subr.mxu0 0.0
    %92 = vmatpush1.msra.mxu0 0.0
    %93 = vmatprep.subr.mxu0 0.0
    %94 = vmatpush1.msra.mxu0 0.0
    %95 = vmatprep.subr.mxu0 0.0
    %96 = vmatpush1.msra.mxu0 0.0
    %97 = vmatprep.subr.mxu0 0.0
    %98 = vmatpush1.msra.mxu0 0.0
    %99 = vmatprep.subr.mxu0 0.0
    %100 = vmatpush1.msra.mxu0 0.0
    %101 = vmatprep.subr.mxu0 0.0
    %102 = vmatpush1.msra.mxu0 0.0
    %103 = vmatprep.subr.mxu0 0.0
    %104 = vmatpush1.msra.mxu0 0.0
    %105 = vmatprep.subr.mxu0 0.0
    %106 = vmatpush1.msra.mxu0 0.0
    %107 = vmatprep.subr.mxu0 0.0
    %108 = vmatpush1.msra.mxu0 0.0
    %109 = vmatprep.subr.mxu0 0.0
    %110 = vmatpush1.msra.mxu0 0.0
    %111 = vmatprep.subr.mxu0 0.0
    %112 = vmatpush1.msra.mxu0 0.0
    %113 = vmatprep.subr.mxu0 0.0
    %114 = vmatpush1.msra.mxu0 0.0
    %115 = vmatprep.subr.mxu0 0.0
    %116 = vmatpush1.msra.mxu0 0.0
    %117 = vmatprep.subr.mxu0 0.0
    %118 = vmatpush1.msra.mxu0 0.0
    %119 = vmatprep.subr.mxu0 0.0
    %120 = vmatpush1.msra.mxu0 0.0
    %121 = vmatprep.subr.mxu0 0.0
    %122 = vmatpush1.msra.mxu0 0.0
    %123 = vmatprep.subr.mxu0 0.0
    %124 = vmatpush1.msra.mxu0 0.0
    %125 = vmatprep.mubr.f32.mxu0 0.0
    %126 = vmatmul.mubr.f32.gmra.mrb[0].mxu0 %v56
    %v127 = vpop.f32.mrb[0].mxu0
    %v128 = vadd.f32 %v52, %v127
    %v129 = vpop.f32.mrb[0].mxu0
    %130 = vmatprep.mubr.f32.mxu0 0.0
    %131 = vmatmul.mubr.f32.gmra.mrb[0].mxu0 %v59
    %v132 = vpop.f32.mrb[0].mxu0
    %v133 = vadd.f32 %v52, %v132
    %v134 = vpop.f32.mrb[0].mxu0
    %135 = vdwg.mxu0
    %v136 = vmax.f32 %v128, 0.0
    %v137 = vmax.f32 %v133, 0.0
    %v138 = vld [vmem:[%s4] sm:$0xff]
    %v139 = vld [vmem:[%s4 + $0x8] sm:$0xff]
    %v140 = vld [vmem:[%s4 + $0x10] sm:$0xff]
    %v141 = vld [vmem:[%s4 + $0x18] sm:$0xff]
    %v142 = vld [vmem:[%s5] sm:$0x1]
    %v144 = vlaneseq
    %v145 = vshrl.u32 %v144, 7
    %v146 = vsub.s32 0, %v145
    %v147 = vrot.slane %v142, %v146
    %v150 = vsel %vm36, %v136, 0
    %v153 = vsel %vm36, %v137, 0
    %155 = vmatprep.subr.mxu0 0.0
    %156 = vmatpush1.msra.mxu0 %v138
    %157 = vmatprep.subr.mxu0 0.0
    %158 = vmatpush1.msra.mxu0 %v139
    %159 = vmatprep.subr.mxu0 0.0
    %160 = vmatpush1.msra.mxu0 %v140
    %161 = vmatprep.subr.mxu0 0.0
    %162 = vmatpush1.msra.mxu0 %v141
    %163 = vmatprep.subr.mxu0 0.0
    %164 = vmatpush1.msra.mxu0 0.0
    %165 = vmatprep.subr.mxu0 0.0
    %166 = vmatpush1.msra.mxu0 0.0
    %167 = vmatprep.subr.mxu0 0.0
    %168 = vmatpush1.msra.mxu0 0.0
    %169 = vmatprep.subr.mxu0 0.0
    %170 = vmatpush1.msra.mxu0 0.0
    %171 = vmatprep.subr.mxu0 0.0
    %172 = vmatpush1.msra.mxu0 0.0
    %173 = vmatprep.subr.mxu0 0.0
    %174 = vmatpush1.msra.mxu0 0.0
    %175 = vmatprep.subr.mxu0 0.0
    %176 = vmatpush1.msra.mxu0 0.0
    %177 = vmatprep.subr.mxu0 0.0
    %178 = vmatpush1.msra.mxu0 0.0
    %179 = vmatprep.subr.mxu0 0.0
    %180 = vmatpush1.msra.mxu0 0.0
    %181 = vmatprep.subr.mxu0 0.0
    %182 = vmatpush1.msra.mxu0 0.0
    %183 = vmatprep.subr.mxu0 0.0
    %184 = vmatpush1.msra.mxu0 0.0
    %185 = vmatprep.subr.mxu0 0.0
    %186 = vmatpush1.msra.mxu0 0.0
    %187 = vmatprep.subr.mxu0 0.0
    %188 = vmatpush1.msra.mxu0 0.0
    %189 = vmatprep.subr.mxu0 0.0
    %190 = vmatpush1.msra.mxu0 0.0
    %191 = vmatprep.subr.mxu0 0.0
    %192 = vmatpush1.msra.mxu0 0.0
    %193 = vmatprep.subr.mxu0 0.0
    %194 = vmatpush1.msra.mxu0 0.0
    %195 = vmatprep.subr.mxu0 0.0
    %196 = vmatpush1.msra.mxu0 0.0
    %197 = vmatprep.subr.mxu0 0.0
    %198 = vmatpush1.msra.mxu0 0.0
    %199 = vmatprep.subr.mxu0 0.0
    %200 = vmatpush1.msra.mxu0 0.0
    %201 = vmatprep.subr.mxu0 0.0
    %202 = vmatpush1.msra.mxu0 0.0
    %203 = vmatprep.subr.mxu0 0.0
    %204 = vmatpush1.msra.mxu0 0.0
    %205 = vmatprep.subr.mxu0 0.0
    %206 = vmatpush1.msra.mxu0 0.0
    %207 = vmatprep.subr.mxu0 0.0
    %208 = vmatpush1.msra.mxu0 0.0
    %209 = vmatprep.subr.mxu0 0.0
    %210 = vmatpush1.msra.mxu0 0.0
    %211 = vmatprep.subr.mxu0 0.0
    %212 = vmatpush1.msra.mxu0 0.0
    %213 = vmatprep.subr.mxu0 0.0
    %214 = vmatpush1.msra.mxu0 0.0
    %215 = vmatprep.subr.mxu0 0.0
    %216 = vmatpush1.msra.mxu0 0.0
    %217 = vmatprep.subr.mxu0 0.0
    %218 = vmatpush1.msra.mxu0 0.0
    %219 = vmatprep.mubr.f32.mxu0 0.0
    %220 = vmatmul.mubr.f32.gmra.mrb[0].mxu0 %v150
    %v221 = vpop.f32.mrb[0].mxu0
    %v222 = vadd.f32 %v147, %v221
    %v223 = vpop.f32.mrb[0].mxu0
    %224 = vmatprep.mubr.f32.mxu0 0.0
    %225 = vmatmul.mubr.f32.gmra.mrb[0].mxu0 %v153
    %v226 = vpop.f32.mrb[0].mxu0
    %v227 = vadd.f32 %v147, %v226
    %v228 = vpop.f32.mrb[0].mxu0
    %229 = vdwg.mxu0
    %vm230 = vcmask 130048
    %231 = vst.msk [vmem:[#allocation2] sm:$0xff] %vm230, %v222
    %232 = vst.msk [vmem:[#allocation2 + $0x8] sm:$0xff] %vm230, %v227
    // Predicated region
    $region26: #{tpu_custom_call.1} parent=1 // pred_check
      _
    $region27: #{tpu_custom_call.1} parent=1 // pred_check_branch
      %234 = sbr.rel (0) target = $region29
    $region28: #{tpu_custom_call.1} parent=1 // pred_region
      %s236 = ssub.s32 256, 256
      %237 = vsyncadd [#allocation3], %s236
      %s238 = sshll.u32 [#allocation2], 4
      %s239 = int_to_ptr.vmem [resolvable:$true] %s238
      %244 = dma.vmem_to_hbm [thread:$0]  %s239, 256, %s6, [#allocation3], 128, 128, 8
    $region29: #{tpu_custom_call.1} parent=1 // pred_fallthru
      _
    // Predicated region
    $region30: #{tpu_custom_call.1} parent=1 // pred_check
      _
    $region31: #{tpu_custom_call.1} parent=1 // pred_check_branch
      %246 = sbr.rel (0) target = $region33
    $region32: #{tpu_custom_call.1} parent=1 // pred_region
      %247 = dma.done [#allocation3], 256
    $region33: #{tpu_custom_call.1} parent=1 // pred_fallthru
      _
    %248 = vsyncpa [#allocation3], 1

</llo_original>
